<compile_context>
chip_gen: v7x
topology: tpu7x:2x2x1
jax: 0.10.0
libtpu: 0.0.40
codegen_flags: <defaults>
</compile_context>

<pallas_src>
import jax
import jax.numpy as jnp
from jax.experimental import pallas as pl
from jax.experimental.pallas import tpu as pltpu


def _round_up(x, m):
    return ((x + m - 1) // m) * m


def _critic_kernel(x_ref, w1_ref, b1_ref, w2_ref, b2_ref, wv_ref, bv_ref, out_ref):
    # ---- extractor layer 1: (TB, D) @ (D, H) on the MXU, f32 accumulation ----
    x = x_ref[...].astype(jnp.bfloat16)                       # VPU cast; obs streamed in native dtype
    h1 = jnp.dot(x, w1_ref[...], preferred_element_type=jnp.float32)
    h1 = jnp.maximum(h1 + b1_ref[...], 0.0)                   # f32 bias + ReLU on the VPU (v5e-safe)

    # ---- extractor layer 2: (TB, H) @ (H, F) ----
    h2 = jnp.dot(h1.astype(jnp.bfloat16), w2_ref[...], preferred_element_type=jnp.float32)
    h2 = jnp.maximum(h2 + b2_ref[...], 0.0)                   # (TB, F) f32

    # ---- value head ----
    # Contract the feature axis with the RHS transposed (same dimension numbers as the
    # flash-attention q@k.T pattern).  wv_ref is the (F,) head weight replicated to 8 rows so the
    # MXU sees an M=8 LHS; all result rows are identical.  The result (8, TB) has the batch index
    # on the LANE axis, so the store below is a handful of full-width lane-dense vst's instead of
    # TB/8 masked width-1 stores.
    v = jax.lax.dot_general(
        wv_ref[...], h2, (((1,), (1,)), ((), ())),
        preferred_element_type=jnp.float32,
    )                                                          # (8, TB) f32
    out_ref[...] = v[0:1, :] + bv_ref[0]                       # scalar bias from SMEM


def marl_ppo_critic_forward(obs, params, *, block_b=1024):
    """obs: [B, obs_dim].  Returns values: [B] float32 (== Linear(F,1)(extractor(obs)).squeeze(-1))."""
    w1, b1, w2, b2, wv8, bv = params
    B, D = obs.shape
    H = w1.shape[1]
    F = w2.shape[1]

    # Lane-dense multi-tile output requires the tile width to be a multiple of 128.
    assert block_b % 128 == 0

    tb = min(block_b, _round_up(B, 8))          # single (sublane-aligned) tile for small B
    b_pad = _round_up(B, tb)
    num_tiles = b_pad // tb
    if b_pad != B:
        obs = jnp.pad(obs, ((0, b_pad - B), (0, 0)))

    out = pl.pallas_call(
        _critic_kernel,
        out_shape=jax.ShapeDtypeStruct((1, b_pad), jnp.float32),   # values along the lane axis
        grid=(num_tiles,),
        in_specs=[
            # obs: streamed (TB, D) tiles -> double-buffered, DMA overlaps compute
            pl.BlockSpec((tb, D), lambda i: (i, 0)),
            # weights / biases: resident in VMEM, DMA'd once
            pl.BlockSpec((D, H), lambda i: (0, 0)),
            pl.BlockSpec((1, H), lambda i: (0, 0)),
            pl.BlockSpec((H, F), lambda i: (0, 0)),
            pl.BlockSpec((1, F), lambda i: (0, 0)),
            pl.BlockSpec((8, F), lambda i: (0, 0)),
            # scalar value-head bias in SMEM
            pl.BlockSpec(memory_space=pltpu.MemorySpace.SMEM),
        ],
        out_specs=pl.BlockSpec((1, tb), lambda i: (0, i)),
        compiler_params=pltpu.CompilerParams(
            dimension_semantics=("parallel",),        # v7x: split batch tiles across both TCs
            vmem_limit_bytes=32 * 1024 * 1024,        # explicit, v7x(64 MiB)-safe; actual use << 1 MiB
        ),
    )(obs, w1, b1, w2, b2, wv8, bv)

    # .squeeze(dim=-1) of the PyTorch module; drop batch padding.
    return out[0, :B]


def init_params(key, obs_dim, hidden_dim, output_dim):
    """PyTorch nn.Linear-style U[-1/sqrt(fan_in), +1/sqrt(fan_in)] init, packed for the kernel:
       - matmul weights stored (in, out) as bf16 (resident, streamed to the MXU)
       - biases kept f32 (added to f32 MXU accumulators)
       - value-head weight replicated to (8, F) f32 rows (MXU-friendly M=8 trans-B contraction)
       - value-head bias as a (1,) f32 scalar (lives in SMEM)."""
    ks = jax.random.split(key, 6)

    def lin(kw, kb, fan_in, fan_out):
        bound = 1.0 / (fan_in ** 0.5)
        w = jax.random.uniform(kw, (fan_in, fan_out), jnp.float32, -bound, bound)
        b = jax.random.uniform(kb, (1, fan_out), jnp.float32, -bound, bound)
        return w, b

    w1, b1 = lin(ks[0], ks[1], obs_dim, hidden_dim)
    w2, b2 = lin(ks[2], ks[3], hidden_dim, output_dim)
    wv, bv = lin(ks[4], ks[5], output_dim, 1)           # wv: (F, 1), bv: (1, 1)

    wv8 = jnp.tile(wv.T, (8, 1)).astype(jnp.float32)    # (8, F), identical rows
    return (w1.astype(jnp.bfloat16), b1,
            w2.astype(jnp.bfloat16), b2,
            wv8, bv.reshape(1))


def reference_forward(obs, params):
    """Pure-JAX reference with the same bf16 rounding the kernel applies."""
    w1, b1, w2, b2, wv8, bv = params
    x = obs.astype(jnp.bfloat16)
    h1 = jnp.maximum(jnp.dot(x, w1, preferred_element_type=jnp.float32) + b1, 0.0)
    h2 = jnp.maximum(jnp.dot(h1.astype(jnp.bfloat16), w2, preferred_element_type=jnp.float32) + b2, 0.0)
    return h2 @ wv8[0] + bv[0]


if __name__ == "__main__":
    key = jax.random.PRNGKey(0)
    k_obs, k_par = jax.random.split(key)

    OBS_DIM, HIDDEN, OUT_DIM = 32, 64, 32     # extractor.output_dim = 32
    NUM_POLICY = 2                            # stored on the module; unused in forward

    params = init_params(k_par, OBS_DIM, HIDDEN, OUT_DIM)

    # Tiny single-tile case (module-scale example).
    obs_small = jax.random.normal(k_obs, (8, OBS_DIM), jnp.float32)
    v_small = marl_ppo_critic_forward(obs_small, params)
    jax.block_until_ready(v_small)
    ref_small = reference_forward(obs_small, params)
    assert v_small.shape == (8,)
    assert jnp.allclose(v_small, ref_small, atol=2e-3, rtol=2e-3)

    # Multi-tile case: exercises the batch grid, resident weights, batch padding and the
    # lane-dense (1, TB) output blocks (still a small problem; block_b shrunk to force 3 tiles).
    obs_big = jax.random.normal(k_obs, (300, OBS_DIM), jnp.float32)
    v_big = marl_ppo_critic_forward(obs_big, params, block_b=128)
    jax.block_until_ready(v_big)
    ref_big = reference_forward(obs_big, params)
    assert v_big.shape == (300,)
    assert jnp.allclose(v_big, ref_big, atol=2e-3, rtol=2e-3)

    print("KERNEL_OK")
</pallas_src>

<mosaic_0001>
module attributes {stable_mosaic.version = 11 : i64} {
  func.func @_critic_kernel(%arg0: i32, %arg1: memref<8x32xf32, #tpu.memory_space<vmem>>, %arg2: memref<32x64xbf16, #tpu.memory_space<vmem>>, %arg3: memref<1x64xf32, #tpu.memory_space<vmem>>, %arg4: memref<64x32xbf16, #tpu.memory_space<vmem>>, %arg5: memref<1x32xf32, #tpu.memory_space<vmem>>, %arg6: memref<8x32xf32, #tpu.memory_space<vmem>>, %arg7: memref<1xf32, #tpu.memory_space<smem>>, %arg8: memref<1x8xf32, #tpu.memory_space<vmem>>) attributes {dimension_semantics = [#tpu.dimension_semantics<parallel>], iteration_bounds = array<i64: 1>, scalar_prefetch = 0 : i64, scratch_operands = 0 : i64, tpu.core_type = #tpu.core_type<tc>, window_params = [{transform_indices = @transform_0, window_bounds = array<i64: 8, 32>}, {pipeline_mode = #tpu.pipeline_mode<synchronous>, transform_indices = @transform_1, window_bounds = array<i64: 32, 64>}, {pipeline_mode = #tpu.pipeline_mode<synchronous>, transform_indices = @transform_2, window_bounds = array<i64: 1, 64>}, {pipeline_mode = #tpu.pipeline_mode<synchronous>, transform_indices = @transform_3, window_bounds = array<i64: 64, 32>}, {pipeline_mode = #tpu.pipeline_mode<synchronous>, transform_indices = @transform_4, window_bounds = array<i64: 1, 32>}, {pipeline_mode = #tpu.pipeline_mode<synchronous>, transform_indices = @transform_5, window_bounds = array<i64: 8, 32>}, {transform_indices = @transform_6, window_bounds = array<i64: 1>}, {transform_indices = @transform_7, window_bounds = array<i64: 1, 8>}]} {
    %c0 = arith.constant 0 : index
    %c0_0 = arith.constant 0 : index
    %0 = vector.load %arg1[%c0, %c0_0] : memref<8x32xf32, #tpu.memory_space<vmem>>, vector<8x32xf32>
    %1 = arith.truncf %0 : vector<8x32xf32> to vector<8x32xbf16>
    %c0_1 = arith.constant 0 : index
    %c0_2 = arith.constant 0 : index
    %2 = vector.load %arg2[%c0_1, %c0_2] : memref<32x64xbf16, #tpu.memory_space<vmem>>, vector<32x64xbf16>
    %cst = arith.constant dense<0.000000e+00> : vector<8x64xf32>
    %3 = tpu.matmul %1, %2, %cst {dimension_numbers = #tpu.dot_dimension_numbers<[1], [0], [0], [1], [0, 0, 1, 1], [], []>} : vector<8x32xbf16>, vector<32x64xbf16>, vector<8x64xf32> -> vector<8x64xf32>
    %c0_3 = arith.constant 0 : index
    %c0_4 = arith.constant 0 : index
    %4 = vector.load %arg3[%c0_3, %c0_4] : memref<1x64xf32, #tpu.memory_space<vmem>>, vector<1x64xf32>
    %5 = vector.broadcast %4 : vector<1x64xf32> to vector<8x64xf32>
    %6 = arith.addf %3, %5 : vector<8x64xf32>
    %cst_5 = arith.constant 0.000000e+00 : f32
    %7 = vector.broadcast %cst_5 : f32 to vector<8x64xf32>
    %8 = arith.maximumf %6, %7 : vector<8x64xf32>
    %9 = arith.truncf %8 : vector<8x64xf32> to vector<8x64xbf16>
    %c0_6 = arith.constant 0 : index
    %c0_7 = arith.constant 0 : index
    %10 = vector.load %arg4[%c0_6, %c0_7] : memref<64x32xbf16, #tpu.memory_space<vmem>>, vector<64x32xbf16>
    %cst_8 = arith.constant dense<0.000000e+00> : vector<8x32xf32>
    %11 = tpu.matmul %9, %10, %cst_8 {dimension_numbers = #tpu.dot_dimension_numbers<[1], [0], [0], [1], [0, 0, 1, 1], [], []>} : vector<8x64xbf16>, vector<64x32xbf16>, vector<8x32xf32> -> vector<8x32xf32>
    %c0_9 = arith.constant 0 : index
    %c0_10 = arith.constant 0 : index
    %12 = vector.load %arg5[%c0_9, %c0_10] : memref<1x32xf32, #tpu.memory_space<vmem>>, vector<1x32xf32>
    %13 = vector.broadcast %12 : vector<1x32xf32> to vector<8x32xf32>
    %14 = arith.addf %11, %13 : vector<8x32xf32>
    %cst_11 = arith.constant 0.000000e+00 : f32
    %15 = vector.broadcast %cst_11 : f32 to vector<8x32xf32>
    %16 = arith.maximumf %14, %15 : vector<8x32xf32>
    %c0_12 = arith.constant 0 : index
    %c0_13 = arith.constant 0 : index
    %17 = vector.load %arg6[%c0_12, %c0_13] : memref<8x32xf32, #tpu.memory_space<vmem>>, vector<8x32xf32>
    %cst_14 = arith.constant dense<0.000000e+00> : vector<8x8xf32>
    %18 = tpu.matmul %17, %16, %cst_14 {dimension_numbers = #tpu.dot_dimension_numbers<[1], [1], [0], [0], [0, 0, 1, 0], [], []>} : vector<8x32xf32>, vector<8x32xf32>, vector<8x8xf32> -> vector<8x8xf32>
    %19 = vector.extract_strided_slice %18 {offsets = [0, 0], sizes = [1, 8], strides = [1, 1]} : vector<8x8xf32> to vector<1x8xf32>
    %c0_15 = arith.constant 0 : index
    %20 = memref.load %arg7[%c0_15] : memref<1xf32, #tpu.memory_space<smem>>
    %21 = vector.broadcast %20 : f32 to vector<1x8xf32>
    %22 = arith.addf %19, %21 : vector<1x8xf32>
    %c0_16 = arith.constant 0 : index
    %c0_17 = arith.constant 0 : index
    %23 = vector.load %arg8[%c0_16, %c0_17] : memref<1x8xf32, #tpu.memory_space<vmem>>, vector<1x8xf32>
    tpu.vector_store %arg8[%c0_16, %c0_17], %22 {strides = array<i32>} : memref<1x8xf32, #tpu.memory_space<vmem>>, vector<1x8xf32>,
    return
  }
  func.func @transform_0(%arg0: i32) -> (i32, i32) {
    %c0_i32 = arith.constant 0 : i32
    %c0_i32_0 = arith.constant 0 : i32
    return %arg0, %c0_i32 : i32, i32
  }
  func.func @transform_1(%arg0: i32) -> (i32, i32) {
    %c0_i32 = arith.constant 0 : i32
    %c0_i32_0 = arith.constant 0 : i32
    %c0_i32_1 = arith.constant 0 : i32
    return %c0_i32, %c0_i32_0 : i32, i32
  }
  func.func @transform_2(%arg0: i32) -> (i32, i32) {
    %c0_i32 = arith.constant 0 : i32
    %c0_i32_0 = arith.constant 0 : i32
    %c0_i32_1 = arith.constant 0 : i32
    return %c0_i32, %c0_i32_0 : i32, i32
  }
  func.func @transform_3(%arg0: i32) -> (i32, i32) {
    %c0_i32 = arith.constant 0 : i32
    %c0_i32_0 = arith.constant 0 : i32
    %c0_i32_1 = arith.constant 0 : i32
    return %c0_i32, %c0_i32_0 : i32, i32
  }
  func.func @transform_4(%arg0: i32) -> (i32, i32) {
    %c0_i32 = arith.constant 0 : i32
    %c0_i32_0 = arith.constant 0 : i32
    %c0_i32_1 = arith.constant 0 : i32
    return %c0_i32, %c0_i32_0 : i32, i32
  }
  func.func @transform_5(%arg0: i32) -> (i32, i32) {
    %c0_i32 = arith.constant 0 : i32
    %c0_i32_0 = arith.constant 0 : i32
    %c0_i32_1 = arith.constant 0 : i32
    return %c0_i32, %c0_i32_0 : i32, i32
  }
  func.func @transform_6(%arg0: i32) -> i32 {
    %c0_i32 = arith.constant 0 : i32
    %c0_i32_0 = arith.constant 0 : i32
    return %c0_i32 : i32
  }
  func.func @transform_7(%arg0: i32) -> (i32, i32) {
    %c0_i32 = arith.constant 0 : i32
    %c0_i32_0 = arith.constant 0 : i32
    return %c0_i32, %arg0 : i32, i32
  }
}

</mosaic_0001>

<llo_original>
// kernel: tpu_custom_call.1
$region0: #{tpu_custom_call.1}
  #allocation0 [shape = 'u32[]', space=smem, size = 0x4, offset = 0x4, fixed_abs, tag = 'smem constant byte address 0x4 - core index']
  #allocation1 [shape = 'u32[144,128]{1,0:T(1,128)}', space=vmem, size = 0x12000, scoped, tag = 'internal scratch']
  #allocation2 [shape = 'f32[1]{0:T(128)S(6)}', space=smem, size = 0x200, scoped, tag = 'scoped memory for tpu_custom_call.1']
  %s0 = inlined_call_operand.vmem [shape: f32[8,32], index: 0, kind: input, shape index: {}]
  %s1 = inlined_call_operand.vmem [shape: bf16[32,64], index: 1, kind: input, shape index: {}]
  %s2 = inlined_call_operand.vmem [shape: f32[1,64], index: 2, kind: input, shape index: {}]
  %s3 = inlined_call_operand.vmem [shape: bf16[64,32], index: 3, kind: input, shape index: {}]
  %s4 = inlined_call_operand.vmem [shape: f32[1,32], index: 4, kind: input, shape index: {}]
  %s5 = inlined_call_operand.vmem [shape: f32[8,32], index: 5, kind: input, shape index: {}]
  %s6 = inlined_call_operand.<no memory space> [shape: f32[1], index: 6, kind: input, shape index: {}]
  %s7 = inlined_call_operand.hbm [shape: f32[1,8], index: 7, kind: output, shape index: {}]
  %s8 = sld [smem:[#allocation0]]
  $region38: #{tpu_custom_call.1} parent=0
    _
  %s10 = ssub.s32 1, %s8
  %s11 = scalar_select 0, %s10, %s8
  %12 = sst [smem:[#allocation2]] %s6
  $region1: #{tpu_custom_call.1} parent=0
    #allocation3 [shape = 'u8[512]{0}', space=vmem, size = 0x400, scoped, tag = 'output window, operand 0, single buffered']
    #allocation4 [shape = 's32[1]{0}', space=sflag, size = 0x4, scoped, tag = 'scoped memory for tpu_custom_call.1']
    %13 = vsyncpa [#allocation4], 0
    // Predicated region
    $region2: #{tpu_custom_call.1} parent=1 // pred_check
      _
    $region3: #{tpu_custom_call.1} parent=1 // pred_check_branch
      %15 = sbr.rel (0) target = $region5
    $region4: #{tpu_custom_call.1} parent=1 // pred_region
      _
    $region5: #{tpu_custom_call.1} parent=1 // pred_fallthru
      _
    // Predicated region
    $region6: #{tpu_custom_call.1} parent=1 // pred_check
      _
    $region7: #{tpu_custom_call.1} parent=1 // pred_check_branch
      %17 = sbr.rel (0) target = $region9
    $region8: #{tpu_custom_call.1} parent=1 // pred_region
      _
    $region9: #{tpu_custom_call.1} parent=1 // pred_fallthru
      _
    // Predicated region
    $region10: #{tpu_custom_call.1} parent=1 // pred_check
      _
    $region11: #{tpu_custom_call.1} parent=1 // pred_check_branch
      %19 = sbr.rel (0) target = $region13
    $region12: #{tpu_custom_call.1} parent=1 // pred_region
      _
    $region13: #{tpu_custom_call.1} parent=1 // pred_fallthru
      _
    // Predicated region
    $region14: #{tpu_custom_call.1} parent=1 // pred_check
      _
    $region15: #{tpu_custom_call.1} parent=1 // pred_check_branch
      %21 = sbr.rel (0) target = $region17
    $region16: #{tpu_custom_call.1} parent=1 // pred_region
      _
    $region17: #{tpu_custom_call.1} parent=1 // pred_fallthru
      _
    // Predicated region
    $region18: #{tpu_custom_call.1} parent=1 // pred_check
      _
    $region19: #{tpu_custom_call.1} parent=1 // pred_check_branch
      %23 = sbr.rel (0) target = $region21
    $region20: #{tpu_custom_call.1} parent=1 // pred_region
      _
    $region21: #{tpu_custom_call.1} parent=1 // pred_fallthru
      _
    // Predicated region
    $region22: #{tpu_custom_call.1} parent=1 // pred_check
      _
    $region23: #{tpu_custom_call.1} parent=1 // pred_check_branch
      %25 = sbr.rel (0) target = $region25
    $region24: #{tpu_custom_call.1} parent=1 // pred_region
      _
    $region25: #{tpu_custom_call.1} parent=1 // pred_fallthru
      _
    // Predicated region
    $region26: #{tpu_custom_call.1} parent=1 // pred_check
      _
    $region27: #{tpu_custom_call.1} parent=1 // pred_check_branch
      %27 = sbr.rel (0) target = $region29
    $region28: #{tpu_custom_call.1} parent=1 // pred_region
      _
    $region29: #{tpu_custom_call.1} parent=1 // pred_fallthru
      _
    %v29 = vld [vmem:[%s0] sm:$0xff]
    %v30 = vpack.c.bf16 %v29, %v29
    %v31 = vld [vmem:[%s1] sm:$0xf]
    %v32 = vld [vmem:[%s1 + $0x4] sm:$0xf]
    %v33 = vld [vmem:[%s1 + $0x8] sm:$0xf]
    %v34 = vld [vmem:[%s1 + $0xc] sm:$0xf]
    %v35 = vld [vmem:[%s2] sm:$0x1]
    %v37 = vlaneseq
    %v38 = vshrl.u32 %v37, 7
    %v39 = vsub.s32 0, %v38
    %v40 = vrot.slane %v35, %v39
    %v46 = vunpack.c.l.b16 %v31
    %v47 = vunpack.c.l.b16 %v32
    %v48 = vunpack.c.l.b16 %v33
    %v49 = vunpack.c.l.b16 %v34
    %v50 = vpack.c.b16 %v47, %v46
    %v51 = vpack.c.b16 %v49, %v48
    %vm54 = vcmask 261120
    %v56 = vsel %vm54, %v30, 0
    %58 = vmatprep.subr.bf16.mxu0 0
    %59 = vmatpush1.bf16.msra.mxu0 %v50
    %60 = vmatprep.subr.bf16.mxu0 0
    %61 = vmatpush1.bf16.msra.mxu0 %v51
    %62 = vmatprep.subr.bf16.mxu0 0
    %63 = vmatpush1.bf16.msra.mxu0 0
    %64 = vmatprep.subr.bf16.mxu0 0
    %65 = vmatpush1.bf16.msra.mxu0 0
    %66 = vmatprep.subr.bf16.mxu0 0
    %67 = vmatpush1.bf16.msra.mxu0 0
    %68 = vmatprep.subr.bf16.mxu0 0
    %69 = vmatpush1.bf16.msra.mxu0 0
    %70 = vmatprep.subr.bf16.mxu0 0
    %71 = vmatpush1.bf16.msra.mxu0 0
    %72 = vmatprep.subr.bf16.mxu0 0
    %73 = vmatpush1.bf16.msra.mxu0 0
    %74 = vmatprep.subr.bf16.mxu0 0
    %75 = vmatpush1.bf16.msra.mxu0 0
    %76 = vmatprep.subr.bf16.mxu0 0
    %77 = vmatpush1.bf16.msra.mxu0 0
    %78 = vmatprep.subr.bf16.mxu0 0
    %79 = vmatpush1.bf16.msra.mxu0 0
    %80 = vmatprep.subr.bf16.mxu0 0
    %81 = vmatpush1.bf16.msra.mxu0 0
    %82 = vmatprep.subr.bf16.mxu0 0
    %83 = vmatpush1.bf16.msra.mxu0 0
    %84 = vmatprep.subr.bf16.mxu0 0
    %85 = vmatpush1.bf16.msra.mxu0 0
    %86 = vmatprep.subr.bf16.mxu0 0
    %87 = vmatpush1.bf16.msra.mxu0 0
    %88 = vmatprep.subr.bf16.mxu0 0
    %89 = vmatpush1.bf16.msra.mxu0 0
    %90 = vmatprep.mubr.bf16.mxu0 0
    %91 = vmatmul.mubr.bf16.gmra.mrb[0].mxu0 %v56
    %v92 = vpop.f32.mrb[0].mxu0
    %v93 = vadd.f32 %v40, %v92
    %v94 = vpop.f32.mrb[0].mxu0
    %v95 = vpop.f32.mrb[0].mxu0
    %v96 = vpop.f32.mrb[0].mxu0
    %97 = vdwg.mxu0
    %v98 = vmax.f32 %v93, 0.0
    %v99 = vpack.c.bf16 %v98, %v98
    %v100 = vld [vmem:[%s3] sm:$0xf]
    %v101 = vld [vmem:[%s3 + $0x4] sm:$0xf]
    %v102 = vld [vmem:[%s3 + $0x8] sm:$0xf]
    %v103 = vld [vmem:[%s3 + $0xc] sm:$0xf]
    %v104 = vld [vmem:[%s3 + $0x10] sm:$0xf]
    %v105 = vld [vmem:[%s3 + $0x14] sm:$0xf]
    %v106 = vld [vmem:[%s3 + $0x18] sm:$0xf]
    %v107 = vld [vmem:[%s3 + $0x1c] sm:$0xf]
    %v108 = vld [vmem:[%s4] sm:$0x1]
    %v110 = vlaneseq
    %v111 = vshrl.u32 %v110, 7
    %v112 = vsub.s32 0, %v111
    %v113 = vrot.slane %v108, %v112
    %v123 = vunpack.c.l.b16 %v100
    %v124 = vunpack.c.l.b16 %v101
    %v125 = vunpack.c.l.b16 %v102
    %v126 = vunpack.c.l.b16 %v103
    %v127 = vunpack.c.l.b16 %v104
    %v128 = vunpack.c.l.b16 %v105
    %v129 = vunpack.c.l.b16 %v106
    %v130 = vunpack.c.l.b16 %v107
    %v131 = vpack.c.b16 %v124, %v123
    %v132 = vpack.c.b16 %v126, %v125
    %v133 = vpack.c.b16 %v128, %v127
    %v134 = vpack.c.b16 %v130, %v129
    %vm139 = vcmask 523264
    %v141 = vsel %vm139, %v99, 0
    %143 = vmatprep.subr.bf16.mxu0 0
    %144 = vmatpush1.bf16.msra.mxu0 %v131
    %145 = vmatprep.subr.bf16.mxu0 0
    %146 = vmatpush1.bf16.msra.mxu0 %v132
    %147 = vmatprep.subr.bf16.mxu0 0
    %148 = vmatpush1.bf16.msra.mxu0 %v133
    %149 = vmatprep.subr.bf16.mxu0 0
    %150 = vmatpush1.bf16.msra.mxu0 %v134
    %151 = vmatprep.subr.bf16.mxu0 0
    %152 = vmatpush1.bf16.msra.mxu0 0
    %153 = vmatprep.subr.bf16.mxu0 0
    %154 = vmatpush1.bf16.msra.mxu0 0
    %155 = vmatprep.subr.bf16.mxu0 0
    %156 = vmatpush1.bf16.msra.mxu0 0
    %157 = vmatprep.subr.bf16.mxu0 0
    %158 = vmatpush1.bf16.msra.mxu0 0
    %159 = vmatprep.subr.bf16.mxu0 0
    %160 = vmatpush1.bf16.msra.mxu0 0
    %161 = vmatprep.subr.bf16.mxu0 0
    %162 = vmatpush1.bf16.msra.mxu0 0
    %163 = vmatprep.subr.bf16.mxu0 0
    %164 = vmatpush1.bf16.msra.mxu0 0
    %165 = vmatprep.subr.bf16.mxu0 0
    %166 = vmatpush1.bf16.msra.mxu0 0
    %167 = vmatprep.subr.bf16.mxu0 0
    %168 = vmatpush1.bf16.msra.mxu0 0
    %169 = vmatprep.subr.bf16.mxu0 0
    %170 = vmatpush1.bf16.msra.mxu0 0
    %171 = vmatprep.subr.bf16.mxu0 0
    %172 = vmatpush1.bf16.msra.mxu0 0
    %173 = vmatprep.subr.bf16.mxu0 0
    %174 = vmatpush1.bf16.msra.mxu0 0
    %175 = vmatprep.mubr.bf16.mxu0 0
    %176 = vmatmul.mubr.bf16.gmra.mrb[0].mxu0 %v141
    %v177 = vpop.f32.mrb[0].mxu0
    %v178 = vadd.f32 %v113, %v177
    %v179 = vpop.f32.mrb[0].mxu0
    %v180 = vpop.f32.mrb[0].mxu0
    %v181 = vpop.f32.mrb[0].mxu0
    %182 = vdwg.mxu0
    %v183 = vmax.f32 %v178, 0.0
    %v184 = vld [vmem:[%s5] sm:$0xff]
    %v186 = vsel %vm54, %v184, 0
    %v189 = vsel %vm54, %v183, 0
    %191 = vmatprep.subr.mxu0 0.0
    %192 = vmatpush1.xpose.msra.mxu0 %v189
    %193 = vmatprep.subr.mxu0 0.0
    %194 = vmatpush1.xpose.msra.mxu0 0.0
    %195 = vmatprep.subr.mxu0 0.0
    %196 = vmatpush1.xpose.msra.mxu0 0.0
    %197 = vmatprep.subr.mxu0 0.0
    %198 = vmatpush1.xpose.msra.mxu0 0.0
    %199 = vmatprep.subr.mxu0 0.0
    %200 = vmatpush1.xpose.msra.mxu0 0.0
    %201 = vmatprep.subr.mxu0 0.0
    %202 = vmatpush1.xpose.msra.mxu0 0.0
    %203 = vmatprep.subr.mxu0 0.0
    %204 = vmatpush1.xpose.msra.mxu0 0.0
    %205 = vmatprep.subr.mxu0 0.0
    %206 = vmatpush1.xpose.msra.mxu0 0.0
    %207 = vmatprep.subr.mxu0 0.0
    %208 = vmatpush1.xpose.msra.mxu0 0.0
    %209 = vmatprep.subr.mxu0 0.0
    %210 = vmatpush1.xpose.msra.mxu0 0.0
    %211 = vmatprep.subr.mxu0 0.0
    %212 = vmatpush1.xpose.msra.mxu0 0.0
    %213 = vmatprep.subr.mxu0 0.0
    %214 = vmatpush1.xpose.msra.mxu0 0.0
    %215 = vmatprep.subr.mxu0 0.0
    %216 = vmatpush1.xpose.msra.mxu0 0.0
    %217 = vmatprep.subr.mxu0 0.0
    %218 = vmatpush1.xpose.msra.mxu0 0.0
    %219 = vmatprep.subr.mxu0 0.0
    %220 = vmatpush1.xpose.msra.mxu0 0.0
    %221 = vmatprep.subr.mxu0 0.0
    %222 = vmatpush1.xpose.msra.mxu0 0.0
    %223 = vmatprep.subr.mxu0 0.0
    %224 = vmatpush1.xpose.msra.mxu0 0.0
    %225 = vmatprep.subr.mxu0 0.0
    %226 = vmatpush1.xpose.msra.mxu0 0.0
    %227 = vmatprep.subr.mxu0 0.0
    %228 = vmatpush1.xpose.msra.mxu0 0.0
    %229 = vmatprep.subr.mxu0 0.0
    %230 = vmatpush1.xpose.msra.mxu0 0.0
    %231 = vmatprep.subr.mxu0 0.0
    %232 = vmatpush1.xpose.msra.mxu0 0.0
    %233 = vmatprep.subr.mxu0 0.0
    %234 = vmatpush1.xpose.msra.mxu0 0.0
    %235 = vmatprep.subr.mxu0 0.0
    %236 = vmatpush1.xpose.msra.mxu0 0.0
    %237 = vmatprep.subr.mxu0 0.0
    %238 = vmatpush1.xpose.msra.mxu0 0.0
    %239 = vmatprep.subr.mxu0 0.0
    %240 = vmatpush1.xpose.msra.mxu0 0.0
    %241 = vmatprep.subr.mxu0 0.0
    %242 = vmatpush1.xpose.msra.mxu0 0.0
    %243 = vmatprep.subr.mxu0 0.0
    %244 = vmatpush1.xpose.msra.mxu0 0.0
    %245 = vmatprep.subr.mxu0 0.0
    %246 = vmatpush1.xpose.msra.mxu0 0.0
    %247 = vmatprep.subr.mxu0 0.0
    %248 = vmatpush1.xpose.msra.mxu0 0.0
    %249 = vmatprep.subr.mxu0 0.0
    %250 = vmatpush1.xpose.msra.mxu0 0.0
    %251 = vmatprep.subr.mxu0 0.0
    %252 = vmatpush1.xpose.msra.mxu0 0.0
    %253 = vmatprep.subr.mxu0 0.0
    %254 = vmatpush1.xpose.msra.mxu0 0.0
    %255 = vmatprep.mubr.f32.mxu0 0.0
    %256 = vmatmul.mubr.f32.gmra.mrb[0].mxu0 %v186
    %v257 = vpop.f32.mrb[0].mxu0
    %v258 = vadd.f32 0.0, %v257
    %v259 = vpop.f32.mrb[0].mxu0
    %260 = vdwg.mxu0
    %s261 = sld [smem:[#allocation2]]
    %v262 = vstv %s261
    %v263 = vadd.f32 %v258, %v262
    %vm264 = vcmask 57344
    %265 = vst.msk [vmem:[#allocation3] sm:$0x1] %vm264, %v263
    // Predicated region
    $region30: #{tpu_custom_call.1} parent=1 // pred_check
      _
    $region31: #{tpu_custom_call.1} parent=1 // pred_check_branch
      %267 = sbr.rel (0) target = $region33
    $region32: #{tpu_custom_call.1} parent=1 // pred_region
      %s269 = ssub.s32 16, 16
      %270 = vsyncadd [#allocation4], %s269
      %s272 = sshll.u32 [#allocation3], 4
      %s273 = int_to_ptr.vmem [resolvable:$true] %s272
      %275 = dma.vmem_to_hbm [thread:$0]  %s273, 16, %s7, [#allocation4]
    $region33: #{tpu_custom_call.1} parent=1 // pred_fallthru
      _
    // Predicated region
    $region34: #{tpu_custom_call.1} parent=1 // pred_check
      _
    $region35: #{tpu_custom_call.1} parent=1 // pred_check_branch
      %277 = sbr.rel (0) target = $region37
    $region36: #{tpu_custom_call.1} parent=1 // pred_region
      %278 = dma.done [#allocation4], 16
    $region37: #{tpu_custom_call.1} parent=1 // pred_fallthru
      _
    %279 = vsyncpa [#allocation4], 1

</llo_original>
